<compile_context>
chip_gen: v5e
topology: v5e:2x2
jax: 0.10.0
libtpu: 0.0.40
codegen_flags: <defaults>
</compile_context>

<pallas_src>
import functools

import jax
import jax.numpy as jnp
from jax.experimental import pallas as pl
from jax.experimental.pallas import tpu as pltpu

LANE = 128          # TPU lane width: align every channel dim to this
ROW_TILE = 256      # preferred output-row tile (full MXU pass)
K_TILE = 2048       # preferred contraction (node) tile for A_hat @ XW
VMEM_LIMIT = 48 * 1024 * 1024   # safe under v7x's 64 MiB physical VMEM


def _round_up(x, m):
    return (x + m - 1) // m * m


def _pad2d(a, rows, cols):
    return jnp.pad(a, ((0, rows - a.shape[0]), (0, cols - a.shape[1])))


def _pick_tile(n_pad, candidates):
    for t in candidates:
        if n_pad % t == 0:
            return t
    return n_pad


def _node_padding_and_tiles(n):
    """Adaptive node padding + (row tile, K tile) that both divide n_pad."""
    if n <= 1024:
        n_pad = _round_up(n, 128)      # small graphs: minimal lane-aligned pad
    elif n <= 8192:
        n_pad = _round_up(n, 512)
    else:
        n_pad = _round_up(n, 2048)     # large graphs: enable the big K tile
    tm = _pick_tile(n_pad, (ROW_TILE, 128))
    tk = _pick_tile(n_pad, (K_TILE, 1024, 512, 256, 128))
    return n_pad, tm, tk


# ----------------------------------------------------------------------------
# Kernel 1: hoisted feature transform  XW = X @ W   (row-tiled over nodes)
# ----------------------------------------------------------------------------
def transform_kernel(x_ref, w_ref, o_ref):
    o_ref[...] = jnp.dot(
        x_ref[...], w_ref[...], preferred_element_type=jnp.float32
    ).astype(o_ref.dtype)


def _feature_transform(x_p, w_p, *, tm):
    n_pad, c_in = x_p.shape
    c_out = w_p.shape[1]
    return pl.pallas_call(
        transform_kernel,
        out_shape=jax.ShapeDtypeStruct((n_pad, c_out), jnp.bfloat16),
        grid_spec=pltpu.PrefetchScalarGridSpec(
            num_scalar_prefetch=0,
            grid=(n_pad // tm,),
            in_specs=[
                pl.BlockSpec((tm, c_in), lambda i: (i, 0)),     # X row tile
                pl.BlockSpec((c_in, c_out), lambda i: (0, 0)),  # W (resident)
            ],
            out_specs=pl.BlockSpec((tm, c_out), lambda i: (i, 0)),
        ),
        compiler_params=pltpu.CompilerParams(
            dimension_semantics=("parallel",),
            vmem_limit_bytes=VMEM_LIMIT,
        ),
        cost_estimate=pl.CostEstimate(
            flops=2 * n_pad * c_in * c_out,
            transcendentals=0,
            bytes_accessed=x_p.size * 2 + w_p.size * 2 + n_pad * c_out * 2),
    )(x_p, w_p)


# ----------------------------------------------------------------------------
# Kernel 2: aggregation  OUT = maybe_relu(A_hat @ XW + b), K-tiled contraction
# ----------------------------------------------------------------------------
def aggregate_kernel(a_ref, xw_ref, b_ref, o_ref, acc_ref, *, apply_relu):
    """One (row tile, K tile) step.

    a_ref:   (tm, tk)   bf16   A_hat tile
    xw_ref:  (tk, C)    bf16   pre-transformed features for this K slab
    b_ref:   (1, C)     f32    bias
    o_ref:   (tm, C)           output row tile (written on last K step)
    acc_ref: (tm, C)    f32    VMEM accumulator (persists across K steps)
    """
    k = pl.program_id(1)

    @pl.when(k == 0)
    def _():
        acc_ref[...] = jnp.zeros_like(acc_ref)

    acc_ref[...] += jnp.dot(a_ref[...], xw_ref[...],
                            preferred_element_type=jnp.float32)

    @pl.when(k == pl.num_programs(1) - 1)
    def _():
        h = acc_ref[...] + b_ref[...]
        if apply_relu:
            h = jnp.maximum(h, 0.0)
        o_ref[...] = h.astype(o_ref.dtype)


def _aggregate(a_p, xw_p, b_p, *, apply_relu, out_dtype, tm, tk):
    n_rows, n_k = a_p.shape
    c_out = xw_p.shape[1]
    grid = (n_rows // tm, n_k // tk)

    # Deeper A_hat buffering hides exposed DMA on the HBM-bound stream
    # (main win on v5e/v6e); footprint stays tiny, so it is safe on v7x too.
    if grid[1] >= 3:
        a_spec = pl.BlockSpec((tm, tk), lambda i, k: (i, k),
                              pipeline_mode=pl.Buffered(3))
    else:
        a_spec = pl.BlockSpec((tm, tk), lambda i, k: (i, k))

    kernel = functools.partial(aggregate_kernel, apply_relu=apply_relu)

    bytes_accessed = (a_p.size * 2                      # A streamed once
                      + grid[0] * xw_p.size * 2         # XW re-read per row tile
                      + b_p.size * 4
                      + n_rows * c_out * jnp.dtype(out_dtype).itemsize)

    return pl.pallas_call(
        kernel,
        out_shape=jax.ShapeDtypeStruct((n_rows, c_out), out_dtype),
        grid_spec=pltpu.PrefetchScalarGridSpec(
            num_scalar_prefetch=0,
            grid=grid,
            in_specs=[
                a_spec,                                                # A tile
                pl.BlockSpec((tk, c_out), lambda i, k: (k, 0)),        # XW slab
                pl.BlockSpec((1, c_out), lambda i, k: (0, 0)),         # bias
            ],
            out_specs=pl.BlockSpec((tm, c_out), lambda i, k: (i, 0)),
            scratch_shapes=[pltpu.VMEM((tm, c_out), jnp.float32)],
        ),
        compiler_params=pltpu.CompilerParams(
            # Row tiles independent -> megacore/parallel; K is the reduction.
            dimension_semantics=("parallel", "arbitrary"),
            vmem_limit_bytes=VMEM_LIMIT,
        ),
        cost_estimate=pl.CostEstimate(
            flops=2 * n_rows * n_k * c_out,
            transcendentals=0,
            bytes_accessed=bytes_accessed),
    )(a_p, xw_p, b_p)


# ----------------------------------------------------------------------------
# Two-layer GCN forward
# ----------------------------------------------------------------------------
def gcn_forward(a_hat, x, w1, b1, w2, b2):
    """relu(A_hat @ (X @ W1) + b1) -> A_hat @ (H @ W2) + b2.  Returns f32 [N, out]."""
    n = x.shape[0]
    c_in, c_hid = w1.shape
    c_out = w2.shape[1]

    n_pad, tm, tk = _node_padding_and_tiles(n)
    cin_p = _round_up(c_in, LANE)
    chid_p = _round_up(c_hid, LANE)
    cout_p = _round_up(c_out, LANE)

    # Zero-pad to lane/tile-aligned shapes.  Padded A_hat columns are zero, so
    # padded nodes never contaminate real output rows; padded rows/channels are
    # sliced off at the end.  Matmul operands go to bf16 (MXU-native); biases
    # and accumulation stay f32.
    # TODO(synk): on v7x, A_hat could be stored in fp8 (bandwidth-bound stream)
    # after numerical validation; keep bf16 here for portability.
    a_p = _pad2d(a_hat, n_pad, n_pad).astype(jnp.bfloat16)
    x_p = _pad2d(x, n_pad, cin_p).astype(jnp.bfloat16)
    w1_p = _pad2d(w1, cin_p, chid_p).astype(jnp.bfloat16)
    w2_p = _pad2d(w2, chid_p, cout_p).astype(jnp.bfloat16)
    b1_p = _pad2d(b1.reshape(1, -1), 1, chid_p).astype(jnp.float32)
    b2_p = _pad2d(b2.reshape(1, -1), 1, cout_p).astype(jnp.float32)

    # Layer 1: hoisted transform, then K-tiled aggregation with ReLU.
    xw1 = _feature_transform(x_p, w1_p, tm=tm)
    h = _aggregate(a_p, xw1, b1_p, apply_relu=True,
                   out_dtype=jnp.bfloat16, tm=tm, tk=tk)
    # NOTE: padded rows of `h` equal relu(b1) (harmless: A_hat's padded
    # columns are zero); never consume `h` without slicing.

    # Layer 2: transform on H, then aggregation without activation (f32 out).
    hw2 = _feature_transform(h, w2_p, tm=tm)
    out_p = _aggregate(a_p, hw2, b2_p, apply_relu=False,
                       out_dtype=jnp.float32, tm=tm, tk=tk)
    return out_p[:n, :c_out]


def build_normalized_adjacency(edge_index, num_nodes):
    """Dense A_hat = D^-1/2 (A + I) D^-1/2 following PyG GCNConv gcn_norm."""
    # TODO(synk): for large sparse graphs, replace this dense O(N^2) A_hat with
    # a CSR scalar-prefetch gather/accumulate Pallas design.
    src, dst = edge_index[0], edge_index[1]
    adj = jnp.zeros((num_nodes, num_nodes), jnp.float32)
    adj = adj.at[dst, src].add(1.0)                       # message src -> dst
    adj = adj + jnp.eye(num_nodes, dtype=jnp.float32)     # self-loops
    deg = adj.sum(axis=1)
    dinv = jnp.where(deg > 0, 1.0 / jnp.sqrt(deg), 0.0)
    return dinv[:, None] * adj * dinv[None, :]


def glorot(key, shape):
    fan_in, fan_out = shape
    limit = (6.0 / (fan_in + fan_out)) ** 0.5
    return jax.random.uniform(key, shape, jnp.float32, -limit, limit)


if __name__ == "__main__":
    # Small, deterministic problem: 16 nodes, in=8, hidden=32, out=16
    N = 16
    in_channels, hidden_channels, out_channels = 8, 32, 16

    key = jax.random.PRNGKey(0)
    kx, k1, k2, kb1, kb2 = jax.random.split(key, 5)

    x = jax.random.normal(kx, (N, in_channels), jnp.float32)

    # Deterministic undirected ring graph: edges i <-> (i+1) mod N
    fwd_src = jnp.arange(N, dtype=jnp.int32)
    fwd_dst = (fwd_src + 1) % N
    src = jnp.concatenate([fwd_src, fwd_dst])
    dst = jnp.concatenate([fwd_dst, fwd_src])
    edge_index = jnp.stack([src, dst], axis=0)  # [2, E]

    a_hat = build_normalized_adjacency(edge_index, N)

    w1 = glorot(k1, (in_channels, hidden_channels))
    b1 = 0.1 * jax.random.normal(kb1, (hidden_channels,), jnp.float32)
    w2 = glorot(k2, (hidden_channels, out_channels))
    b2 = 0.1 * jax.random.normal(kb2, (out_channels,), jnp.float32)

    out = jax.block_until_ready(gcn_forward(a_hat, x, w1, b1, w2, b2))

    # Pure-JAX f32 reference of the same math (kernel uses bf16 operands with
    # f32 accumulation, so compare with a correspondingly loose tolerance).
    h_ref = jnp.maximum(a_hat @ (x @ w1) + b1, 0.0)
    ref = a_hat @ (h_ref @ w2) + b2
    assert out.shape == (N, out_channels)
    max_err = float(jnp.max(jnp.abs(out - ref)))
    assert jnp.allclose(out, ref, atol=3e-2, rtol=3e-2), f"max_err={max_err}"

    print("KERNEL_OK")
</pallas_src>

<mosaic_0001>
module attributes {stable_mosaic.version = 11 : i64} {
  func.func @transform_kernel(%arg0: i32, %arg1: memref<128x128xbf16, #tpu.memory_space<vmem>>, %arg2: memref<128x128xbf16, #tpu.memory_space<vmem>>, %arg3: memref<128x128xbf16, #tpu.memory_space<vmem>>) attributes {dimension_semantics = [#tpu.dimension_semantics<parallel>], iteration_bounds = array<i64: 1>, scalar_prefetch = 0 : i64, scratch_operands = 0 : i64, tpu.core_type = #tpu.core_type<tc>, window_params = [{transform_indices = @transform_0, window_bounds = array<i64: 128, 128>}, {pipeline_mode = #tpu.pipeline_mode<synchronous>, transform_indices = @transform_1, window_bounds = array<i64: 128, 128>}, {transform_indices = @transform_2, window_bounds = array<i64: 128, 128>}]} {
    %c0 = arith.constant 0 : index
    %c0_0 = arith.constant 0 : index
    %0 = vector.load %arg1[%c0, %c0_0] : memref<128x128xbf16, #tpu.memory_space<vmem>>, vector<128x128xbf16>
    %c0_1 = arith.constant 0 : index
    %c0_2 = arith.constant 0 : index
    %1 = vector.load %arg2[%c0_1, %c0_2] : memref<128x128xbf16, #tpu.memory_space<vmem>>, vector<128x128xbf16>
    %cst = arith.constant dense<0.000000e+00> : vector<128x128xf32>
    %2 = tpu.matmul %0, %1, %cst {dimension_numbers = #tpu.dot_dimension_numbers<[1], [0], [0], [1], [0, 0, 1, 1], [], []>} : vector<128x128xbf16>, vector<128x128xbf16>, vector<128x128xf32> -> vector<128x128xf32>
    %3 = arith.truncf %2 : vector<128x128xf32> to vector<128x128xbf16>
    %c0_3 = arith.constant 0 : index
    %c0_4 = arith.constant 0 : index
    %4 = vector.load %arg3[%c0_3, %c0_4] : memref<128x128xbf16, #tpu.memory_space<vmem>>, vector<128x128xbf16>
    tpu.vector_store %arg3[%c0_3, %c0_4], %3 {strides = array<i32>} : memref<128x128xbf16, #tpu.memory_space<vmem>>, vector<128x128xbf16>,
    return
  }
  func.func @transform_0(%arg0: i32) -> (i32, i32) {
    %c0_i32 = arith.constant 0 : i32
    %c0_i32_0 = arith.constant 0 : i32
    return %arg0, %c0_i32 : i32, i32
  }
  func.func @transform_1(%arg0: i32) -> (i32, i32) {
    %c0_i32 = arith.constant 0 : i32
    %c0_i32_0 = arith.constant 0 : i32
    %c0_i32_1 = arith.constant 0 : i32
    return %c0_i32, %c0_i32_0 : i32, i32
  }
  func.func @transform_2(%arg0: i32) -> (i32, i32) {
    %c0_i32 = arith.constant 0 : i32
    %c0_i32_0 = arith.constant 0 : i32
    return %arg0, %c0_i32 : i32, i32
  }
}

</mosaic_0001>

<llo_original>
// kernel: tpu_custom_call.1
$region0: #{tpu_custom_call.1}
  #allocation0 [shape = 'u32[]', space=smem, size = 0x4, offset = 0x4, fixed_abs, tag = 'smem constant byte address 0x4 - core index']
  #allocation1 [shape = 'u32[72,128]{1,0:T(1,128)}', space=vmem, size = 0x9000, scoped, tag = 'internal scratch']
  %s0 = inlined_call_operand.hbm [shape: bf16[128,128], index: 0, kind: input, shape index: {}]
  %s1 = inlined_call_operand.hbm [shape: bf16[128,128], index: 1, kind: input, shape index: {}]
  %s2 = inlined_call_operand.hbm [shape: bf16[128,128], index: 2, kind: output, shape index: {}]
  %s3 = sld [smem:[#allocation0]]
  $region26: #{tpu_custom_call.1} parent=0
    _
  %s5 = ssub.s32 1, %s3
  %s6 = scalar_select 0, %s5, %s3
  $region1: #{tpu_custom_call.1} parent=0
    #allocation2 [shape = 'u8[32768]{0}', space=vmem, size = 0x8000, scoped, tag = 'input window, operand 0, single buffered']
    #allocation3 [shape = 's32[1]{0}', space=sflag, size = 0x4, scoped, tag = 'scoped memory for tpu_custom_call.1']
    #allocation4 [shape = 's32[1]{0}', space=sflag, size = 0x4, scoped, tag = 'scoped memory for tpu_custom_call.1']
    #allocation5 [shape = 'u8[32768]{0}', space=vmem, size = 0x8000, scoped, tag = 'input window, operand 1, single buffered']
    #allocation6 [shape = 's32[1]{0}', space=sflag, size = 0x4, scoped, tag = 'scoped memory for tpu_custom_call.1']
    #allocation7 [shape = 'u8[32768]{0}', space=vmem, size = 0x8000, scoped, tag = 'output window, operand 0, single buffered']
    %7 = vsyncpa [#allocation3], 0
    %8 = vsyncpa [#allocation6], 0
    %9 = vsyncpa [#allocation4], 0
    // Predicated region
    $region2: #{tpu_custom_call.1} parent=1 // pred_check
      _
    $region3: #{tpu_custom_call.1} parent=1 // pred_check_branch
      %11 = sbr.rel (0) target = $region5
    $region4: #{tpu_custom_call.1} parent=1 // pred_region
      %13 = vsyncadd [#allocation3], 0
      %s14 = sshll.u32 %s0, 4
      %s15 = int_to_ptr.hbm [resolvable:$true] %s14
      %s16 = sshll.u32 [#allocation2], 4
      %s17 = int_to_ptr.vmem [resolvable:$true] %s16
      %22 = dma.hbm_to_vmem [thread:$0]  %s15, 1024, %s17, [#allocation3], 64, 64, 4
    $region5: #{tpu_custom_call.1} parent=1 // pred_fallthru
      _
    // Predicated region
    $region6: #{tpu_custom_call.1} parent=1 // pred_check
      _
    $region7: #{tpu_custom_call.1} parent=1 // pred_check_branch
      %24 = sbr.rel (0) target = $region9
    $region8: #{tpu_custom_call.1} parent=1 // pred_region
      %26 = vsyncadd [#allocation6], 0
      %s27 = sshll.u32 %s1, 4
      %s28 = int_to_ptr.hbm [resolvable:$true] %s27
      %s29 = sshll.u32 [#allocation5], 4
      %s30 = int_to_ptr.vmem [resolvable:$true] %s29
      %35 = dma.hbm_to_vmem [thread:$0]  %s28, 1024, %s30, [#allocation6], 64, 64, 4
    $region9: #{tpu_custom_call.1} parent=1 // pred_fallthru
      _
    // Predicated region
    $region10: #{tpu_custom_call.1} parent=1 // pred_check
      _
    $region11: #{tpu_custom_call.1} parent=1 // pred_check_branch
      %37 = sbr.rel (0) target = $region13
    $region12: #{tpu_custom_call.1} parent=1 // pred_region
      %39 = dma.done [#allocation3], 1024
    $region13: #{tpu_custom_call.1} parent=1 // pred_fallthru
      _
    // Predicated region
    $region14: #{tpu_custom_call.1} parent=1 // pred_check
      _
    $region15: #{tpu_custom_call.1} parent=1 // pred_check_branch
      %41 = sbr.rel (0) target = $region17
    $region16: #{tpu_custom_call.1} parent=1 // pred_region
      %43 = dma.done [#allocation6], 1024
    $region17: #{tpu_custom_call.1} parent=1 // pred_fallthru
      _
    %v44 = vld [vmem:[#allocation2] sm:$0xf]
    %v45 = vld [vmem:[#allocation2 + $0x4] sm:$0xf]
    %v46 = vld [vmem:[#allocation2 + $0x8] sm:$0xf]
    %v47 = vld [vmem:[#allocation2 + $0xc] sm:$0xf]
    %v48 = vld [vmem:[#allocation2 + $0x10] sm:$0xf]
    %v49 = vld [vmem:[#allocation2 + $0x14] sm:$0xf]
    %v50 = vld [vmem:[#allocation2 + $0x18] sm:$0xf]
    %v51 = vld [vmem:[#allocation2 + $0x1c] sm:$0xf]
    %v52 = vld [vmem:[#allocation2 + $0x20] sm:$0xf]
    %v53 = vld [vmem:[#allocation2 + $0x24] sm:$0xf]
    %v54 = vld [vmem:[#allocation2 + $0x28] sm:$0xf]
    %v55 = vld [vmem:[#allocation2 + $0x2c] sm:$0xf]
    %v56 = vld [vmem:[#allocation2 + $0x30] sm:$0xf]
    %v57 = vld [vmem:[#allocation2 + $0x34] sm:$0xf]
    %v58 = vld [vmem:[#allocation2 + $0x38] sm:$0xf]
    %v59 = vld [vmem:[#allocation2 + $0x3c] sm:$0xf]
    %v60 = vld [vmem:[#allocation5] sm:$0xf]
    %v61 = vld [vmem:[#allocation5 + $0x4] sm:$0xf]
    %v62 = vld [vmem:[#allocation5 + $0x8] sm:$0xf]
    %v63 = vld [vmem:[#allocation5 + $0xc] sm:$0xf]
    %v64 = vld [vmem:[#allocation5 + $0x10] sm:$0xf]
    %v65 = vld [vmem:[#allocation5 + $0x14] sm:$0xf]
    %v66 = vld [vmem:[#allocation5 + $0x18] sm:$0xf]
    %v67 = vld [vmem:[#allocation5 + $0x1c] sm:$0xf]
    %v68 = vld [vmem:[#allocation5 + $0x20] sm:$0xf]
    %v69 = vld [vmem:[#allocation5 + $0x24] sm:$0xf]
    %v70 = vld [vmem:[#allocation5 + $0x28] sm:$0xf]
    %v71 = vld [vmem:[#allocation5 + $0x2c] sm:$0xf]
    %v72 = vld [vmem:[#allocation5 + $0x30] sm:$0xf]
    %v73 = vld [vmem:[#allocation5 + $0x34] sm:$0xf]
    %v74 = vld [vmem:[#allocation5 + $0x38] sm:$0xf]
    %v75 = vld [vmem:[#allocation5 + $0x3c] sm:$0xf]
    %v92 = vunpack.c.l.b16 %v44
    %v93 = vunpack.c.l.b16 %v45
    %v94 = vunpack.c.l.b16 %v46
    %v95 = vunpack.c.l.b16 %v47
    %v96 = vunpack.c.l.b16 %v48
    %v97 = vunpack.c.l.b16 %v49
    %v98 = vunpack.c.l.b16 %v50
    %v99 = vunpack.c.l.b16 %v51
    %v100 = vunpack.c.l.b16 %v52
    %v101 = vunpack.c.l.b16 %v53
    %v102 = vunpack.c.l.b16 %v54
    %v103 = vunpack.c.l.b16 %v55
    %v104 = vunpack.c.l.b16 %v56
    %v105 = vunpack.c.l.b16 %v57
    %v106 = vunpack.c.l.b16 %v58
    %v107 = vunpack.c.l.b16 %v59
    %v108 = vpack.c.b16 %v93, %v92
    %v109 = vpack.c.b16 %v95, %v94
    %v110 = vpack.c.b16 %v97, %v96
    %v111 = vpack.c.b16 %v99, %v98
    %v112 = vpack.c.b16 %v101, %v100
    %v113 = vpack.c.b16 %v103, %v102
    %v114 = vpack.c.b16 %v105, %v104
    %v115 = vpack.c.b16 %v107, %v106
    %v140 = vunpack.c.l.b16 %v60
    %v141 = vunpack.c.l.b16 %v61
    %v142 = vunpack.c.l.b16 %v62
    %v143 = vunpack.c.l.b16 %v63
    %v144 = vunpack.c.l.b16 %v64
    %v145 = vunpack.c.l.b16 %v65
    %v146 = vunpack.c.l.b16 %v66
    %v147 = vunpack.c.l.b16 %v67
    %v148 = vunpack.c.l.b16 %v68
    %v149 = vunpack.c.l.b16 %v69
    %v150 = vunpack.c.l.b16 %v70
    %v151 = vunpack.c.l.b16 %v71
    %v152 = vunpack.c.l.b16 %v72
    %v153 = vunpack.c.l.b16 %v73
    %v154 = vunpack.c.l.b16 %v74
    %v155 = vunpack.c.l.b16 %v75
    %v156 = vpack.c.b16 %v141, %v140
    %v157 = vpack.c.b16 %v143, %v142
    %v158 = vpack.c.b16 %v145, %v144
    %v159 = vpack.c.b16 %v147, %v146
    %v160 = vpack.c.b16 %v149, %v148
    %v161 = vpack.c.b16 %v151, %v150
    %v162 = vpack.c.b16 %v153, %v152
    %v163 = vpack.c.b16 %v155, %v154
    %172 = vmatpush.bf16.msra.mxu0 %v163
    %173 = vmatpush.bf16.msra.mxu0 %v162
    %174 = vmatpush.bf16.msra.mxu0 %v161
    %175 = vmatpush.bf16.msra.mxu0 %v160
    %176 = vmatpush.bf16.msra.mxu0 %v159
    %177 = vmatpush.bf16.msra.mxu0 %v158
    %178 = vmatpush.bf16.msra.mxu0 %v157
    %179 = vmatpush.bf16.msra.mxu0 %v156
    %180 = vmatmul.bf16.gmra.mxu0 %v108
    %v181 = vpop.f32.mrf.mxu0
    %v182 = vadd.f32 0.0, %v181
    %v183 = vpop.f32.mrf.mxu0
    %v184 = vadd.f32 0.0, %v183
    %185 = vmatmul.bf16.gmra.mxu0 %v109
    %v186 = vpop.f32.mrf.mxu0
    %v187 = vadd.f32 0.0, %v186
    %v188 = vpop.f32.mrf.mxu0
    %v189 = vadd.f32 0.0, %v188
    %190 = vmatmul.bf16.gmra.mxu0 %v110
    %v191 = vpop.f32.mrf.mxu0
    %v192 = vadd.f32 0.0, %v191
    %v193 = vpop.f32.mrf.mxu0
    %v194 = vadd.f32 0.0, %v193
    %195 = vmatmul.bf16.gmra.mxu0 %v111
    %v196 = vpop.f32.mrf.mxu0
    %v197 = vadd.f32 0.0, %v196
    %v198 = vpop.f32.mrf.mxu0
    %v199 = vadd.f32 0.0, %v198
    %200 = vmatmul.bf16.gmra.mxu0 %v112
    %v201 = vpop.f32.mrf.mxu0
    %v202 = vadd.f32 0.0, %v201
    %v203 = vpop.f32.mrf.mxu0
    %v204 = vadd.f32 0.0, %v203
    %205 = vmatmul.bf16.gmra.mxu0 %v113
    %v206 = vpop.f32.mrf.mxu0
    %v207 = vadd.f32 0.0, %v206
    %v208 = vpop.f32.mrf.mxu0
    %v209 = vadd.f32 0.0, %v208
    %210 = vmatmul.bf16.gmra.mxu0 %v114
    %v211 = vpop.f32.mrf.mxu0
    %v212 = vadd.f32 0.0, %v211
    %v213 = vpop.f32.mrf.mxu0
    %v214 = vadd.f32 0.0, %v213
    %215 = vmatmul.bf16.gmra.mxu0 %v115
    %v216 = vpop.f32.mrf.mxu0
    %v217 = vadd.f32 0.0, %v216
    %v218 = vpop.f32.mrf.mxu0
    %v219 = vadd.f32 0.0, %v218
    %220 = vdwg.mxu0
    %v221 = vpack.c.bf16 %v182, %v182
    %v222 = vpack.c.bf16 %v184, %v184
    %v223 = vpack.c.bf16 %v187, %v187
    %v224 = vpack.c.bf16 %v189, %v189
    %v225 = vpack.c.bf16 %v192, %v192
    %v226 = vpack.c.bf16 %v194, %v194
    %v227 = vpack.c.bf16 %v197, %v197
    %v228 = vpack.c.bf16 %v199, %v199
    %v229 = vpack.c.bf16 %v202, %v202
    %v230 = vpack.c.bf16 %v204, %v204
    %v231 = vpack.c.bf16 %v207, %v207
    %v232 = vpack.c.bf16 %v209, %v209
    %v233 = vpack.c.bf16 %v212, %v212
    %v234 = vpack.c.bf16 %v214, %v214
    %v235 = vpack.c.bf16 %v217, %v217
    %v236 = vpack.c.bf16 %v219, %v219
    %237 = vst [vmem:[#allocation7] sm:$0xf] %v221
    %238 = vst [vmem:[#allocation7 + $0x4] sm:$0xf] %v222
    %239 = vst [vmem:[#allocation7 + $0x8] sm:$0xf] %v223
    %240 = vst [vmem:[#allocation7 + $0xc] sm:$0xf] %v224
    %241 = vst [vmem:[#allocation7 + $0x10] sm:$0xf] %v225
    %242 = vst [vmem:[#allocation7 + $0x14] sm:$0xf] %v226
    %243 = vst [vmem:[#allocation7 + $0x18] sm:$0xf] %v227
    %244 = vst [vmem:[#allocation7 + $0x1c] sm:$0xf] %v228
    %245 = vst [vmem:[#allocation7 + $0x20] sm:$0xf] %v229
    %246 = vst [vmem:[#allocation7 + $0x24] sm:$0xf] %v230
    %247 = vst [vmem:[#allocation7 + $0x28] sm:$0xf] %v231
    %248 = vst [vmem:[#allocation7 + $0x2c] sm:$0xf] %v232
    %249 = vst [vmem:[#allocation7 + $0x30] sm:$0xf] %v233
    %250 = vst [vmem:[#allocation7 + $0x34] sm:$0xf] %v234
    %251 = vst [vmem:[#allocation7 + $0x38] sm:$0xf] %v235
    %252 = vst [vmem:[#allocation7 + $0x3c] sm:$0xf] %v236
    // Predicated region
    $region18: #{tpu_custom_call.1} parent=1 // pred_check
      _
    $region19: #{tpu_custom_call.1} parent=1 // pred_check_branch
      %254 = sbr.rel (0) target = $region21
    $region20: #{tpu_custom_call.1} parent=1 // pred_region
      %256 = vsyncadd [#allocation4], 0
      %s257 = sshll.u32 [#allocation7], 4
      %s258 = int_to_ptr.vmem [resolvable:$true] %s257
      %s259 = sshll.u32 %s2, 4
      %s260 = int_to_ptr.hbm [resolvable:$true] %s259
      %265 = dma.vmem_to_hbm [thread:$0]  %s258, 1024, %s260, [#allocation4], 64, 64, 4
    $region21: #{tpu_custom_call.1} parent=1 // pred_fallthru
      _
    // Predicated region
    $region22: #{tpu_custom_call.1} parent=1 // pred_check
      _
    $region23: #{tpu_custom_call.1} parent=1 // pred_check_branch
      %267 = sbr.rel (0) target = $region25
    $region24: #{tpu_custom_call.1} parent=1 // pred_region
      %269 = dma.done [#allocation4], 1024
    $region25: #{tpu_custom_call.1} parent=1 // pred_fallthru
      _
    %270 = vsyncpa [#allocation3], 1
    %271 = vsyncpa [#allocation6], 1
    %272 = vsyncpa [#allocation4], 1

</llo_original>
